<compile_context>
chip_gen: v7x
topology: tpu7x:2x2x1
jax: 0.10.0
libtpu: 0.0.40
codegen_flags: <defaults>
</compile_context>

<pallas_src>
import functools

import jax
import jax.numpy as jnp
from jax.experimental import pallas as pl
from jax.experimental.pallas import tpu as pltpu


def _se2_loss_kernel(pred_ref, targ_ref, o_ref, w_ref, acc_ref, *,
                     rg, inv_b, total, tile):
    # pred_ref/targ_ref: (1, tile) flat blocks of [x, y, theta, x, y, theta, ...]
    # o_ref: (1, 1) f32 output in SMEM.
    # w_ref/acc_ref: (1, tile) f32 VMEM scratch (rg-weight pattern / accumulator).
    i = pl.program_id(0)
    last = pl.num_programs(0) - 1

    @pl.when(i == 0)
    def _init():
        lane = jax.lax.broadcasted_iota(jnp.int32, (1, tile), 1)
        # tile % 3 == 0 (or single-block case), so the mod-3 pattern is the
        # same for every block: weight = rg on theta elements, 1 on x/y.
        w_ref[...] = jnp.where(lane % 3 == 2, jnp.float32(rg), jnp.float32(1.0))
        acc_ref[...] = jnp.zeros_like(acc_ref)

    d = pred_ref[...].astype(jnp.float32) - targ_ref[...].astype(jnp.float32)
    wsq = w_ref[...] * (d * d)

    @pl.when(i < last)
    def _accumulate():
        acc_ref[...] += wsq

    @pl.when(i == last)
    def _accumulate_tail_and_finalize():
        # Mask out-of-bounds elements of the (possibly partial) final block via
        # select, so undefined boundary data (even NaN/Inf) contributes nothing.
        lane = jax.lax.broadcasted_iota(jnp.int32, (1, tile), 1)
        valid = (i * tile + lane) < total
        acc_ref[...] += jnp.where(valid, wsq, jnp.float32(0.0))
        o_ref[0, 0] = jnp.sum(acc_ref[...]) * jnp.float32(inv_b)


def se2_pose_loss(pose_pred, pose_target, block_width, block_length, *,
                  tile_elems=None):
    """Pallas equivalent of SE2PoseLoss.forward.

    pose_pred, pose_target: (B, 3) float arrays of SE(2) poses [x, y, theta].
    Returns a scalar float32 loss:
        MSE(x) + MSE(y) + rg * MSE(theta),   rg = sqrt((l^2 + w^2) / 12)
    """
    assert pose_pred.shape == pose_target.shape
    assert pose_pred.ndim == 2 and pose_pred.shape[1] == 3
    b = pose_pred.shape[0]
    total = 3 * b
    rg = float(((block_length ** 2 + block_width ** 2) / 12.0) ** 0.5)

    # Free, contiguity-preserving view: (B, 3) -> (1, 3B).  No copies.
    pred_flat = pose_pred.reshape(1, total)
    targ_flat = pose_target.reshape(1, total)

    # Tile selection: multiples of lcm(3, 128) = 384 elements.  Default cap
    # 384*512 = 196608 elems (768 KiB f32 payload per input per step).
    if tile_elems is None:
        cap = 384 * 512
    else:
        cap = max(384, (int(tile_elems) // 384) * 384)
    if total <= cap:
        tile = total          # single block == full array (always a legal block)
    else:
        tile = cap            # last block is partial; masked in-kernel

    grid = (pl.cdiv(total, tile),)

    # VMEM budget: 2 inputs x 2 pipeline buffers + 2 scratch buffers, each a
    # (1, tile) f32 block that pads to 8 sublanes in VMEM (32 B per element).
    vmem_need = 6 * tile * 32
    vmem_limit = min(96 << 20, max(32 << 20, int(vmem_need * 1.25) + (8 << 20)))

    kernel = functools.partial(_se2_loss_kernel, rg=rg, inv_b=1.0 / b,
                               total=total, tile=tile)

    out = pl.pallas_call(
        kernel,
        out_shape=jax.ShapeDtypeStruct((1, 1), jnp.float32),
        grid_spec=pltpu.PrefetchScalarGridSpec(
            num_scalar_prefetch=0,
            grid=grid,
            in_specs=[
                pl.BlockSpec((1, tile), lambda i: (0, i)),
                pl.BlockSpec((1, tile), lambda i: (0, i)),
            ],
            out_specs=pl.BlockSpec(memory_space=pltpu.SMEM),
            scratch_shapes=[
                pltpu.VMEM((1, tile), jnp.float32),   # rg weight pattern
                pltpu.VMEM((1, tile), jnp.float32),   # elementwise accumulator
            ],
        ),
        compiler_params=pltpu.CompilerParams(
            dimension_semantics=("arbitrary",),
            vmem_limit_bytes=vmem_limit,
        ),
    )(pred_flat, targ_flat)
    return out[0, 0]


def se2_pose_loss_ref(pose_pred, pose_target, block_width, block_length):
    rg = ((block_length ** 2 + block_width ** 2) / 12.0) ** 0.5
    dx = pose_pred[:, 0] - pose_target[:, 0]
    dy = pose_pred[:, 1] - pose_target[:, 1]
    dt = pose_pred[:, 2] - pose_target[:, 2]
    return jnp.mean(dx * dx) + jnp.mean(dy * dy) + rg * jnp.mean(dt * dt)


if __name__ == "__main__":
    # Deterministic module "parameters" (object dimensions from __init__).
    block_width = 0.1
    block_length = 0.1

    key = jax.random.PRNGKey(0)
    k1, k2, k3, k4 = jax.random.split(key, 4)

    # Small case: single block (tile == 24 == full flat extent).
    B = 8
    pose_pred = jax.random.normal(k1, (B, 3), dtype=jnp.float32)
    pose_target = jax.random.normal(k2, (B, 3), dtype=jnp.float32)
    loss = jax.block_until_ready(
        se2_pose_loss(pose_pred, pose_target, block_width, block_length))
    ref = se2_pose_loss_ref(pose_pred, pose_target, block_width, block_length)
    assert jnp.allclose(loss, ref, rtol=1e-5, atol=1e-6), (loss, ref)

    # Multi-step grid + ragged tail: 900 elements, tile 384 -> 3 steps, last
    # block only 132/384 valid.  Exercises init, steady accumulate, tail mask.
    B2 = 300
    pp2 = jax.random.normal(k3, (B2, 3), dtype=jnp.float32)
    pt2 = jax.random.normal(k4, (B2, 3), dtype=jnp.float32)
    loss2 = jax.block_until_ready(
        se2_pose_loss(pp2, pt2, block_width, block_length, tile_elems=384))
    ref2 = se2_pose_loss_ref(pp2, pt2, block_width, block_length)
    assert jnp.allclose(loss2, ref2, rtol=1e-5, atol=1e-6), (loss2, ref2)

    # Same data with the default tile: single exact block (tile == 900).
    loss3 = jax.block_until_ready(
        se2_pose_loss(pp2, pt2, block_width, block_length))
    assert jnp.allclose(loss3, ref2, rtol=1e-5, atol=1e-6), (loss3, ref2)

    print("KERNEL_OK")
</pallas_src>

<mosaic_0001>
module attributes {stable_mosaic.version = 11 : i64} {
  func.func @_se2_loss_kernel(%arg0: i32, %arg1: memref<1x24xf32, #tpu.memory_space<vmem>>, %arg2: memref<1x24xf32, #tpu.memory_space<vmem>>, %arg3: memref<1x1xf32, #tpu.memory_space<smem>>, %arg4: memref<1x24xf32, #tpu.memory_space<vmem>>, %arg5: memref<1x24xf32, #tpu.memory_space<vmem>>) attributes {dimension_semantics = [#tpu.dimension_semantics<arbitrary>], iteration_bounds = array<i64: 1>, scalar_prefetch = 0 : i64, scratch_operands = 2 : i64, tpu.core_type = #tpu.core_type<tc>, window_params = [{transform_indices = @transform_0, window_bounds = array<i64: 1, 24>}, {transform_indices = @transform_1, window_bounds = array<i64: 1, 24>}, {transform_indices = @transform_2, window_bounds = array<i64: 1, 1>}]} {
    %c0_i32 = arith.constant 0 : i32
    %0 = arith.cmpi eq, %arg0, %c0_i32 : i32
    %1 = arith.extui %0 : i1 to i32
    %c0_i32_0 = arith.constant 0 : i32
    %2 = arith.cmpi ne, %1, %c0_i32_0 : i32
    scf.if %2 {
      %15 = tpu.iota {dimensions = array<i32: 1>} : vector<1x24xi32>
      %c3_i32 = arith.constant 3 : i32
      %c0_i32_10 = arith.constant 0 : i32
      %16 = arith.cmpi eq, %c3_i32, %c0_i32_10 : i32
      %c1_i32 = arith.constant 1 : i32
      %17 = arith.select %16, %c1_i32, %c3_i32 : i32
      %18 = vector.broadcast %17 : i32 to vector<1x24xi32>
      %19 = arith.remsi %15, %18 : vector<1x24xi32>
      %c0_i32_11 = arith.constant 0 : i32
      %20 = vector.broadcast %c0_i32_11 : i32 to vector<1x24xi32>
      %21 = arith.cmpi ne, %19, %20 : vector<1x24xi32>
      %c0_i32_12 = arith.constant 0 : i32
      %22 = vector.broadcast %c0_i32_12 : i32 to vector<1x24xi32>
      %23 = arith.cmpi slt, %19, %22 : vector<1x24xi32>
      %c0_i32_13 = arith.constant 0 : i32
      %24 = arith.cmpi slt, %17, %c0_i32_13 : i32
      %25 = vector.broadcast %24 : i1 to vector<1x24xi1>
      %26 = vector.broadcast %25 : vector<1x24xi1> to vector<1x24xi1>
      %27 = arith.xori %23, %26 : vector<1x24xi1>
      %28 = arith.andi %27, %21 : vector<1x24xi1>
      %29 = vector.broadcast %17 : i32 to vector<1x24xi32>
      %30 = arith.addi %19, %29 : vector<1x24xi32>
      %31 = arith.select %28, %30, %19 : vector<1x24xi1>, vector<1x24xi32>
      %c2_i32 = arith.constant 2 : i32
      %32 = vector.broadcast %c2_i32 : i32 to vector<1x24xi32>
      %33 = arith.cmpi eq, %31, %32 : vector<1x24xi32>
      %cst = arith.constant 0.0408248305 : f32
      %cst_14 = arith.constant 1.000000e+00 : f32
      %34 = vector.broadcast %cst : f32 to vector<1x24xf32>
      %35 = vector.broadcast %cst_14 : f32 to vector<1x24xf32>
      %36 = arith.select %33, %34, %35 : vector<1x24xi1>, vector<1x24xf32>
      %c0_15 = arith.constant 0 : index
      %c0_16 = arith.constant 0 : index
      %37 = vector.load %arg4[%c0_15, %c0_16] : memref<1x24xf32, #tpu.memory_space<vmem>>, vector<1x24xf32>
      tpu.vector_store %arg4[%c0_15, %c0_16], %36 {strides = array<i32>} : memref<1x24xf32, #tpu.memory_space<vmem>>, vector<1x24xf32>,
      %cst_17 = arith.constant 0.000000e+00 : f32
      %38 = vector.broadcast %cst_17 : f32 to vector<1x24xf32>
      %c0_18 = arith.constant 0 : index
      %c0_19 = arith.constant 0 : index
      %39 = vector.load %arg5[%c0_18, %c0_19] : memref<1x24xf32, #tpu.memory_space<vmem>>, vector<1x24xf32>
      tpu.vector_store %arg5[%c0_18, %c0_19], %38 {strides = array<i32>} : memref<1x24xf32, #tpu.memory_space<vmem>>, vector<1x24xf32>,
    } else {
    }
    %c0 = arith.constant 0 : index
    %c0_1 = arith.constant 0 : index
    %3 = vector.load %arg1[%c0, %c0_1] : memref<1x24xf32, #tpu.memory_space<vmem>>, vector<1x24xf32>
    %c0_2 = arith.constant 0 : index
    %c0_3 = arith.constant 0 : index
    %4 = vector.load %arg2[%c0_2, %c0_3] : memref<1x24xf32, #tpu.memory_space<vmem>>, vector<1x24xf32>
    %5 = arith.subf %3, %4 : vector<1x24xf32>
    %c0_4 = arith.constant 0 : index
    %c0_5 = arith.constant 0 : index
    %6 = vector.load %arg4[%c0_4, %c0_5] : memref<1x24xf32, #tpu.memory_space<vmem>>, vector<1x24xf32>
    %7 = arith.mulf %5, %5 : vector<1x24xf32>
    %8 = arith.mulf %6, %7 : vector<1x24xf32>
    %c0_i32_6 = arith.constant 0 : i32
    %9 = arith.cmpi slt, %arg0, %c0_i32_6 : i32
    %10 = arith.extui %9 : i1 to i32
    %c0_i32_7 = arith.constant 0 : i32
    %11 = arith.cmpi ne, %10, %c0_i32_7 : i32
    scf.if %11 {
      %c0_10 = arith.constant 0 : index
      %c0_11 = arith.constant 0 : index
      %15 = vector.load %arg5[%c0_10, %c0_11] : memref<1x24xf32, #tpu.memory_space<vmem>>, vector<1x24xf32>
      %16 = arith.addf %15, %8 : vector<1x24xf32>
      %c0_12 = arith.constant 0 : index
      %c0_13 = arith.constant 0 : index
      %17 = vector.load %arg5[%c0_12, %c0_13] : memref<1x24xf32, #tpu.memory_space<vmem>>, vector<1x24xf32>
      tpu.vector_store %arg5[%c0_12, %c0_13], %16 {strides = array<i32>} : memref<1x24xf32, #tpu.memory_space<vmem>>, vector<1x24xf32>,
    } else {
    }
    %c0_i32_8 = arith.constant 0 : i32
    %12 = arith.cmpi eq, %arg0, %c0_i32_8 : i32
    %13 = arith.extui %12 : i1 to i32
    %c0_i32_9 = arith.constant 0 : i32
    %14 = arith.cmpi ne, %13, %c0_i32_9 : i32
    scf.if %14 {
      %15 = tpu.iota {dimensions = array<i32: 1>} : vector<1x24xi32>
      %c24_i32 = arith.constant 24 : i32
      %16 = arith.muli %arg0, %c24_i32 : i32
      %17 = vector.broadcast %16 : i32 to vector<1x24xi32>
      %18 = arith.addi %17, %15 : vector<1x24xi32>
      %c24_i32_10 = arith.constant 24 : i32
      %19 = vector.broadcast %c24_i32_10 : i32 to vector<1x24xi32>
      %20 = arith.cmpi slt, %18, %19 : vector<1x24xi32>
      %c0_11 = arith.constant 0 : index
      %c0_12 = arith.constant 0 : index
      %21 = vector.load %arg5[%c0_11, %c0_12] : memref<1x24xf32, #tpu.memory_space<vmem>>, vector<1x24xf32>
      %cst = arith.constant 0.000000e+00 : f32
      %22 = vector.broadcast %cst : f32 to vector<1x24xf32>
      %23 = arith.select %20, %8, %22 : vector<1x24xi1>, vector<1x24xf32>
      %24 = arith.addf %21, %23 : vector<1x24xf32>
      %c0_13 = arith.constant 0 : index
      %c0_14 = arith.constant 0 : index
      %25 = vector.load %arg5[%c0_13, %c0_14] : memref<1x24xf32, #tpu.memory_space<vmem>>, vector<1x24xf32>
      tpu.vector_store %arg5[%c0_13, %c0_14], %24 {strides = array<i32>} : memref<1x24xf32, #tpu.memory_space<vmem>>, vector<1x24xf32>,
      %c0_15 = arith.constant 0 : index
      %c0_16 = arith.constant 0 : index
      %26 = vector.load %arg5[%c0_15, %c0_16] : memref<1x24xf32, #tpu.memory_space<vmem>>, vector<1x24xf32>
      %27 = vector.shape_cast %26 : vector<1x24xf32> to vector<1x1x24xf32>
      %cst_17 = arith.constant dense<0.000000e+00> : vector<1xf32>
      %28 = vector.multi_reduction <add>, %27, %cst_17 [1, 2] : vector<1x1x24xf32> to vector<1xf32>
      %29 = vector.shape_cast %28 : vector<1xf32> to vector<1x1x1xf32>
      %30 = vector.extract %29[0, 0, 0] : f32 from vector<1x1x1xf32>
      %cst_18 = arith.constant 1.250000e-01 : f32
      %31 = arith.mulf %30, %cst_18 : f32
      %c0_19 = arith.constant 0 : index
      %c0_20 = arith.constant 0 : index
      %32 = memref.load %arg3[%c0_19, %c0_20] : memref<1x1xf32, #tpu.memory_space<smem>>
      memref.store %31, %arg3[%c0_19, %c0_20] : memref<1x1xf32, #tpu.memory_space<smem>>
    } else {
    }
    return
  }
  func.func @transform_0(%arg0: i32) -> (i32, i32) {
    %c0_i32 = arith.constant 0 : i32
    %c0_i32_0 = arith.constant 0 : i32
    return %c0_i32, %arg0 : i32, i32
  }
  func.func @transform_1(%arg0: i32) -> (i32, i32) {
    %c0_i32 = arith.constant 0 : i32
    %c0_i32_0 = arith.constant 0 : i32
    return %c0_i32, %arg0 : i32, i32
  }
  func.func @transform_2(%arg0: i32) -> (i32, i32) {
    %c0_i32 = arith.constant 0 : i32
    %c0_i32_0 = arith.constant 0 : i32
    %c0_i32_1 = arith.constant 0 : i32
    return %c0_i32, %c0_i32_0 : i32, i32
  }
}

</mosaic_0001>

<llo_original>
// kernel: tpu_custom_call.1
$region0: #{tpu_custom_call.1}
  #allocation0 [shape = 'u32[]', space=smem, size = 0x4, offset = 0x4, fixed_abs, tag = 'smem constant byte address 0x4 - core index']
  #allocation1 [shape = 'u32[144,128]{1,0:T(1,128)}', space=vmem, size = 0x12000, scoped, tag = 'internal scratch']
  #allocation2 [shape = 'f32[1,24]{1,0:T(1,128)}', space=vmem, size = 0x200, scoped, tag = 'scratch operand']
  #allocation3 [shape = 'f32[1,24]{1,0:T(1,128)}', space=vmem, size = 0x200, scoped, tag = 'scratch operand']
  %s0 = inlined_call_operand.hbm [shape: f32[1,24], index: 0, kind: input, shape index: {}]
  %s1 = inlined_call_operand.vmem [shape: f32[1,24], index: 1, kind: input, shape index: {}]
  %s2 = inlined_call_operand.hbm [shape: f32[1,1], index: 2, kind: output, shape index: {}]
  %s3 = sld [smem:[#allocation0]]
  $region34: #{tpu_custom_call.1} parent=0
    _
  %s5 = ssub.s32 1, %s3
  %s6 = scalar_select 0, %s5, %s3
  $region1: #{tpu_custom_call.1} parent=0
    #allocation4 [shape = 'u8[512]{0}', space=vmem, size = 0x400, scoped, tag = 'input window, operand 0, single buffered']
    #allocation5 [shape = 's32[1]{0}', space=sflag, size = 0x4, scoped, tag = 'scoped memory for tpu_custom_call.1']
    #allocation6 [shape = 's32[1]{0}', space=sflag, size = 0x4, scoped, tag = 'scoped memory for tpu_custom_call.1']
    #allocation7 [shape = 'u8[512]{0}', space=smem, size = 0x200, scoped, tag = 'output window, operand 0, single buffered']
    %7 = vsyncpa [#allocation5], 0
    %8 = vsyncpa [#allocation6], 0
    // Predicated region
    $region2: #{tpu_custom_call.1} parent=1 // pred_check
      _
    $region3: #{tpu_custom_call.1} parent=1 // pred_check_branch
      %10 = sbr.rel (0) target = $region5
    $region4: #{tpu_custom_call.1} parent=1 // pred_region
      %s12 = ssub.s32 16, 16
      %13 = vsyncadd [#allocation5], %s12
      %s15 = sshll.u32 [#allocation4], 4
      %s16 = int_to_ptr.vmem [resolvable:$true] %s15
      %18 = dma.hbm_to_vmem [thread:$0]  %s0, 16, %s16, [#allocation5]
    $region5: #{tpu_custom_call.1} parent=1 // pred_fallthru
      _
    // Predicated region
    $region6: #{tpu_custom_call.1} parent=1 // pred_check
      _
    $region7: #{tpu_custom_call.1} parent=1 // pred_check_branch
      %20 = sbr.rel (0) target = $region9
    $region8: #{tpu_custom_call.1} parent=1 // pred_region
      _
    $region9: #{tpu_custom_call.1} parent=1 // pred_fallthru
      _
    // Predicated region
    $region10: #{tpu_custom_call.1} parent=1 // pred_check
      _
    $region11: #{tpu_custom_call.1} parent=1 // pred_check_branch
      %22 = sbr.rel (0) target = $region13
    $region12: #{tpu_custom_call.1} parent=1 // pred_region
      %23 = dma.done [#allocation5], 16
    $region13: #{tpu_custom_call.1} parent=1 // pred_fallthru
      _
    %p24 = scmp.eq.s32.totalorder 0, 0
    // Predicated region
    $region14: #{tpu_custom_call.1} parent=1 // pred_check
      %p25 = pneg %p24
    $region15: #{tpu_custom_call.1} parent=1 // pred_check_branch
      %27 = sbr.rel (%p25) target = $region17
    $region16: #{tpu_custom_call.1} parent=1 // pred_region
      %v28 = vlaneseq
      %v29 = vand.u32 %v28, 127
      %vm30 = vcmp.lt.s32.totalorder %v29, 0
      %v31 = vsub.s32 0, %v29
      %v32 = vsel %vm30, %v31, %v29
      %v33 = vmul.u32.u64.compose %v32, 2863311531
      %v34 = vextract.low.u32 %v33
      %v35 = vextract.high.u32 %v33
      %v36 = vshrl.u32 %v35, 1
      %v37 = vmul.u32 %v36, 3
      %v38 = vsub.s32 %v32, %v37
      %v39 = vsub.s32 0, %v38
      %v40 = vsel %vm30, %v39, %v38
      %vm41 = vcmp.ne.s32.totalorder %v40, 0
      %vm42 = vcmp.lt.s32.totalorder %v40, 0
      %vm43 = vmand %vm42, %vm41
      %v44 = vadd.s32 %v40, 3
      %v45 = vsel %vm43, %v44, %v40
      %vm46 = vcmp.eq.s32.totalorder %v45, 2
      %v47 = vsel %vm46, 0.04082483, 1.0
      %vm48 = vcmask 188416
      %49 = vst.msk [vmem:[#allocation2] sm:$0x1] %vm48, %v47
      %50 = vst.msk [vmem:[#allocation3] sm:$0x1] %vm48, 0.0
    $region17: #{tpu_custom_call.1} parent=1 // pred_fallthru
      _
    %v51 = vld [vmem:[#allocation4] sm:$0x1]
    %v52 = vld [vmem:[%s1] sm:$0x1]
    %v53 = vsub.f32 %v51, %v52
    %v54 = vld [vmem:[#allocation2] sm:$0x1]
    %v55 = vmul.f32 %v53, %v53
    %v56 = vmul.f32 %v54, %v55
    %p57 = scmp.lt.s32.totalorder 0, 0
    // Predicated region
    $region18: #{tpu_custom_call.1} parent=1 // pred_check
      %p58 = pneg %p57
    $region19: #{tpu_custom_call.1} parent=1 // pred_check_branch
      %60 = sbr.rel (%p58) target = $region21
    $region20: #{tpu_custom_call.1} parent=1 // pred_region
      %v61 = vld [vmem:[#allocation3] sm:$0x1]
      %v62 = vadd.f32 %v61, %v56
      %vm63 = vcmask 188416
      %64 = vst.msk [vmem:[#allocation3] sm:$0x1] %vm63, %v62
    $region21: #{tpu_custom_call.1} parent=1 // pred_fallthru
      _
    // Predicated region
    $region22: #{tpu_custom_call.1} parent=1 // pred_check
      %p65 = pneg %p24
    $region23: #{tpu_custom_call.1} parent=1 // pred_check_branch
      %67 = sbr.rel (%p65) target = $region25
    $region24: #{tpu_custom_call.1} parent=1 // pred_region
      %v68 = vlaneseq
      %v69 = vand.u32 %v68, 127
      %s70 = smul.u32 0, 24
      %v71 = vstv %s70
      %v72 = vadd.s32 %v71, %v69
      %vm73 = vcmp.lt.s32.totalorder %v72, 24
      %v74 = vld [vmem:[#allocation3] sm:$0x1]
      %v75 = vsel %vm73, %v56, 0.0
      %v76 = vadd.f32 %v74, %v75
      %vm77 = vcmask 188416
      %78 = vst.msk [vmem:[#allocation3] sm:$0x1] %vm77, %v76
      %v79 = vld [vmem:[#allocation3] sm:$0x1]
      %v80 = vsel %vm77, %v79, 0.0
      %81 = vadd.xlane.f32.xlu0 %v80
      %v82 = vpop.xlane.xlu0 %81
      %v83 = vrot.slane %v82, 4
      %v84 = vadd.f32 %v82, %v83
      %v85 = vrot.slane %v84, 2
      %v86 = vadd.f32 %v84, %v85
      %v87 = vrot.slane %v86, 1
      %v88 = vadd.f32 %v86, %v87
      %s89 = vtos %v88
      %s90 = smul.f32 %s89, 0.125
      %s91 = scalar_lea.smem [#allocation7], 0
      %92 = sst [smem:[%s91]] %s90
    $region25: #{tpu_custom_call.1} parent=1 // pred_fallthru
      _
    // Predicated region
    $region26: #{tpu_custom_call.1} parent=1 // pred_check
      _
    $region27: #{tpu_custom_call.1} parent=1 // pred_check_branch
      %94 = sbr.rel (0) target = $region29
    $region28: #{tpu_custom_call.1} parent=1 // pred_region
      %s96 = ssub.s32 16, 16
      %97 = vsyncadd [#allocation6], %s96
      %100 = dma.smem_to_hbm [#allocation7], 16, %s2, [#allocation6]
    $region29: #{tpu_custom_call.1} parent=1 // pred_fallthru
      _
    // Predicated region
    $region30: #{tpu_custom_call.1} parent=1 // pred_check
      _
    $region31: #{tpu_custom_call.1} parent=1 // pred_check_branch
      %102 = sbr.rel (0) target = $region33
    $region32: #{tpu_custom_call.1} parent=1 // pred_region
      %103 = dma.done [#allocation6], 16
    $region33: #{tpu_custom_call.1} parent=1 // pred_fallthru
      _
    %104 = sfence
    %105 = vsyncpa [#allocation5], 1
    %106 = vsyncpa [#allocation6], 1

</llo_original>
